<compile_context>
chip_gen: v5e
topology: v5e:2x2
jax: 0.10.0
libtpu: 0.0.40
codegen_flags: <defaults>
</compile_context>

<pallas_src>
import functools
import math

import jax
import jax.numpy as jnp
from jax.experimental import pallas as pl
from jax.experimental.pallas import tpu as pltpu

HIDDEN = 64            # nn.Linear(N_STATES, 64) / NoisyLinear(64, 64)
HIDDEN_PAD = 128       # lane-padded hidden width used inside the kernel
XLA_SMALL_BATCH = 32   # below this, fused XLA beats a pallas_call launch
MAX_BATCH_TILE = 2048  # VMEM-safe on v5e/v6e/v7x without vmem_limit overrides


def _round_up(n, m):
    return ((n + m - 1) // m) * m


# ------------------------------ Pallas kernel -------------------------------

def net_kernel(x_ref, w1_ref, w2_ref, w3_ref, bias_ref, out_ref):
    """out = relu(relu(x@W1+b1)@W2+b2)@W3+b3 for one batch tile."""
    hp = w1_ref.shape[1]                 # HIDDEN_PAD

    bias = bias_ref[...]                 # (8, OUT_PAD) f32 slab, single load
    b1 = bias[0:1, :hp]                  # (1, HP)
    b2 = bias[1:2, :hp]                  # (1, HP)
    b3 = bias[2:3, :]                    # (1, OUT_PAD); padded cols are zero

    x = x_ref[...]                                                 # (tb, N_STATES)
    h1 = jnp.dot(x, w1_ref[...], preferred_element_type=jnp.float32) + b1
    h1 = jnp.maximum(h1, 0.0)                                      # (tb, HP)

    h2 = jnp.dot(h1, w2_ref[...], preferred_element_type=jnp.float32) + b2
    h2 = jnp.maximum(h2, 0.0)                                      # (tb, HP)

    out = jnp.dot(h2, w3_ref[...], preferred_element_type=jnp.float32) + b3
    out_ref[...] = out.astype(out_ref.dtype)                       # (tb, OUT_PAD)


def _pick_batch_tile(B):
    """Batch tile per perf review: big tiles, >=2 grid steps once B > 512."""
    if B <= 512:
        return max(_round_up(B, 8), 8)          # single tile, one grid step
    # >=2 grid steps so v7x's two TensorCores both get work; cap at 2048 rows
    # (~7 MB double-buffered) to stay inside v5e's 16 MiB scoped-VMEM default.
    return min(MAX_BATCH_TILE, _round_up(pl.cdiv(B, 2), 8))


def _net_forward_pallas(x, eff, n_actions, out_dtype):
    B, n_states = x.shape
    w1, w2, w3, bias_slab = eff["w1"], eff["w2"], eff["w3"], eff["bias_slab"]
    hp = w1.shape[1]
    out_pad = w3.shape[1]

    tb = _pick_batch_tile(B)
    grid = (pl.cdiv(B, tb),)   # ragged last block masked by Pallas; no jnp.pad
                               # round trip over x in HBM.

    flops = 2 * B * (n_states * hp + hp * hp + hp * out_pad)
    bytes_accessed = (
        B * n_states * x.dtype.itemsize
        + (w1.size + w2.size + w3.size + bias_slab.size) * 4
        + B * out_pad * jnp.dtype(out_dtype).itemsize)

    out = pl.pallas_call(
        net_kernel,
        out_shape=jax.ShapeDtypeStruct((B, out_pad), out_dtype),
        grid=grid,
        in_specs=[
            pl.BlockSpec((tb, n_states), lambda i: (i, 0)),   # x: batch-tiled
            pl.BlockSpec((n_states, hp), lambda i: (0, 0)),   # W1: VMEM-resident
            pl.BlockSpec((hp, hp), lambda i: (0, 0)),         # W2 eff: resident
            pl.BlockSpec((hp, out_pad), lambda i: (0, 0)),    # W3 eff: resident
            pl.BlockSpec((8, out_pad), lambda i: (0, 0)),     # packed bias slab
        ],
        out_specs=pl.BlockSpec((tb, out_pad), lambda i: (i, 0)),
        compiler_params=pltpu.CompilerParams(
            dimension_semantics=("parallel",)),
        cost_estimate=pl.CostEstimate(
            flops=flops, transcendentals=0, bytes_accessed=bytes_accessed),
    )(x, w1, w2, w3, bias_slab)
    # Slice stays inside the jit so XLA fuses it with the consumer rather than
    # doing a second full pass over the padded slab.
    return out[:, :n_actions]


def _net_forward_xla(x, eff, n_actions, out_dtype):
    """Fused-XLA path for tiny batches (launch overhead >> 13 KFLOP/row)."""
    hp = eff["w1"].shape[1]
    b1 = eff["bias_slab"][0, :hp]
    b2 = eff["bias_slab"][1, :hp]
    b3 = eff["bias_slab"][2, :n_actions]
    h1 = jnp.maximum(x @ eff["w1"] + b1, 0.0)
    h2 = jnp.maximum(h1 @ eff["w2"] + b2, 0.0)
    return ((h2 @ eff["w3"][:, :n_actions]) + b3).astype(out_dtype)


@functools.partial(jax.jit,
                   static_argnames=("n_actions", "use_pallas", "out_dtype"))
def net_forward(x, eff, n_actions, use_pallas=None, out_dtype=jnp.float32):
    """Full Net forward.

    `eff` comes from make_effective_params() and must be rebuilt after every
    reset_noise() (the noise is baked into the effective weights).
    use_pallas=None -> Pallas kernel for B > 32, fused XLA otherwise.
    """
    B = x.shape[0]
    if use_pallas is None:
        use_pallas = B > XLA_SMALL_BATCH
    if use_pallas:
        return _net_forward_pallas(x, eff, n_actions, out_dtype)
    return _net_forward_xla(x, eff, n_actions, out_dtype)


# -------------------- parameter init & operand preparation ------------------

def scale_noise(key, size):
    """Factorized gaussian noise: sign(x) * sqrt(|x|), x ~ N(0,1)."""
    x = jax.random.normal(key, (size,), dtype=jnp.float32)
    return jnp.sign(x) * jnp.sqrt(jnp.abs(x))


def init_linear(key, in_f, out_f):
    """nn.Linear default init: U(-1/sqrt(in), 1/sqrt(in)) for weight & bias."""
    kw, kb = jax.random.split(key)
    bound = 1.0 / math.sqrt(in_f)
    w = jax.random.uniform(kw, (out_f, in_f), jnp.float32, -bound, bound)
    b = jax.random.uniform(kb, (out_f,), jnp.float32, -bound, bound)
    return w, b


def init_noisy_linear(key, in_f, out_f, std_init=0.5):
    """NoisyLinear.reset_parameters() + reset_noise() semantics."""
    kwm, kbm, kei, keo = jax.random.split(key, 4)
    mu_range = 1.0 / math.sqrt(in_f)
    w_mu = jax.random.uniform(kwm, (out_f, in_f), jnp.float32, -mu_range, mu_range)
    w_sig = jnp.full((out_f, in_f), std_init / math.sqrt(in_f), jnp.float32)
    b_mu = jax.random.uniform(kbm, (out_f,), jnp.float32, -mu_range, mu_range)
    b_sig = jnp.full((out_f,), std_init / math.sqrt(out_f), jnp.float32)
    eps_in = scale_noise(kei, in_f)
    eps_out = scale_noise(keo, out_f)
    return w_mu, w_sig, jnp.outer(eps_out, eps_in), b_mu, b_sig, eps_out


def make_params(key, n_states, n_actions):
    k1, k2, k3 = jax.random.split(key, 3)
    w1, b1 = init_linear(k1, n_states, HIDDEN)
    w2m, w2s, w2e, b2m, b2s, b2e = init_noisy_linear(k2, HIDDEN, HIDDEN)
    w3m, w3s, w3e, b3m, b3s, b3e = init_noisy_linear(k3, HIDDEN, n_actions)
    return {
        "w1": w1, "b1": b1,
        "w2_mu": w2m, "w2_sig": w2s, "w2_eps": w2e,
        "b2_mu": b2m, "b2_sig": b2s, "b2_eps": b2e,
        "w3_mu": w3m, "w3_sig": w3s, "w3_eps": w3e,
        "b3_mu": b3m, "b3_sig": b3s, "b3_eps": b3e,
    }


def make_effective_params(p, n_actions):
    """Collapse NoisyLinear mu/sigma/eps into effective W/b, pre-transpose to
    (in, out), lane-pad hidden width 64 -> 128 and output -> >=128, and pack
    all biases into one (8, OUT_PAD) f32 slab (single DMA).

    Must be re-run whenever the noise buffers change (reset_noise()).  All
    padded weight/bias entries are exactly zero, so padded h1/h2 lanes stay 0
    and padded output columns are exactly 0 (they are sliced off before use).
    """
    out_pad = max(_round_up(n_actions, 128), 128)
    h, hp = HIDDEN, HIDDEN_PAD

    w1 = p["w1"].T                                            # (N_STATES, H)
    b1 = p["b1"]
    w2 = (p["w2_mu"] + p["w2_sig"] * p["w2_eps"]).T           # (H, H)
    b2 = p["b2_mu"] + p["b2_sig"] * p["b2_eps"]
    w3 = (p["w3_mu"] + p["w3_sig"] * p["w3_eps"]).T           # (H, n_actions)
    b3 = p["b3_mu"] + p["b3_sig"] * p["b3_eps"]

    w1 = jnp.pad(w1, ((0, 0), (0, hp - h)))                   # (N_STATES, HP)
    w2 = jnp.pad(w2, ((0, hp - h), (0, hp - h)))              # (HP, HP)
    w3 = jnp.pad(w3, ((0, hp - h), (0, out_pad - n_actions))) # (HP, OUT_PAD)

    bias_slab = jnp.zeros((8, out_pad), jnp.float32)
    bias_slab = bias_slab.at[0, :h].set(b1)
    bias_slab = bias_slab.at[1, :h].set(b2)
    bias_slab = bias_slab.at[2, :n_actions].set(b3)

    return {"w1": w1, "w2": w2, "w3": w3, "bias_slab": bias_slab}


def reference_forward(x, p):
    """Pure-JAX reference (same math as the PyTorch module)."""
    w2 = p["w2_mu"] + p["w2_sig"] * p["w2_eps"]
    b2 = p["b2_mu"] + p["b2_sig"] * p["b2_eps"]
    w3 = p["w3_mu"] + p["w3_sig"] * p["w3_eps"]
    b3 = p["b3_mu"] + p["b3_sig"] * p["b3_eps"]
    h1 = jnp.maximum(x @ p["w1"].T + p["b1"], 0.0)
    h2 = jnp.maximum(h1 @ w2.T + b2, 0.0)
    return h2 @ w3.T + b3


if __name__ == "__main__":
    N_STATES = 16
    N_ACTIONS = 4
    BATCH = 2

    key = jax.random.PRNGKey(0)
    k_x, k_p, k_m, k_l = jax.random.split(key, 4)
    params = make_params(k_p, N_STATES, N_ACTIONS)
    eff = make_effective_params(params, N_ACTIONS)

    # --- tiny batch: force the Pallas path (strict check vs reference) ---
    x = jax.random.normal(k_x, (BATCH, N_STATES), dtype=jnp.float32)
    ref = reference_forward(x, params)
    out = jax.block_until_ready(net_forward(x, eff, N_ACTIONS, use_pallas=True))
    assert out.shape == (BATCH, N_ACTIONS)
    assert jnp.allclose(out, ref, atol=1e-5, rtol=1e-5), "pallas small-batch mismatch"

    # --- tiny batch, default dispatch -> fused-XLA fallback ---
    out_xla = jax.block_until_ready(net_forward(x, eff, N_ACTIONS))
    assert jnp.allclose(out_xla, ref, atol=1e-5, rtol=1e-5), "XLA fallback mismatch"

    # --- ragged batch (not a multiple of 8): exercises masked last block ---
    xm = jax.random.normal(k_m, (300, N_STATES), dtype=jnp.float32)
    out_m = jax.block_until_ready(net_forward(xm, eff, N_ACTIONS))
    ref_m = reference_forward(xm, params)
    assert out_m.shape == (300, N_ACTIONS)
    assert jnp.allclose(out_m, ref_m, atol=1e-4, rtol=1e-4), "ragged-batch mismatch"

    # --- training-size batch: >=2 grid steps (v7x dual-TC), big tiles ---
    xl = jax.random.normal(k_l, (1024, N_STATES), dtype=jnp.float32)
    out_l = jax.block_until_ready(net_forward(xl, eff, N_ACTIONS))
    ref_l = reference_forward(xl, params)
    assert out_l.shape == (1024, N_ACTIONS)
    assert jnp.allclose(out_l, ref_l, atol=1e-4, rtol=1e-4), "gridded mismatch"

    # --- optional bf16 output (halves writeback when feeding argmax/TD) ---
    out_b = jax.block_until_ready(
        net_forward(xl, eff, N_ACTIONS, out_dtype=jnp.bfloat16))
    assert out_b.dtype == jnp.bfloat16
    assert jnp.allclose(out_b.astype(jnp.float32), ref_l, atol=5e-2, rtol=5e-2), \
        "bf16-output mismatch"

    print("KERNEL_OK")
</pallas_src>

<mosaic_0001>
module attributes {stable_mosaic.version = 11 : i64} {
  func.func @net_kernel(%arg0: i32, %arg1: memref<8x16xf32, #tpu.memory_space<vmem>>, %arg2: memref<16x128xf32, #tpu.memory_space<vmem>>, %arg3: memref<128x128xf32, #tpu.memory_space<vmem>>, %arg4: memref<128x128xf32, #tpu.memory_space<vmem>>, %arg5: memref<8x128xf32, #tpu.memory_space<vmem>>, %arg6: memref<8x128xf32, #tpu.memory_space<vmem>>) attributes {dimension_semantics = [#tpu.dimension_semantics<parallel>], iteration_bounds = array<i64: 1>, scalar_prefetch = 0 : i64, scratch_operands = 0 : i64, tpu.core_type = #tpu.core_type<tc>, window_params = [{transform_indices = @transform_0, window_bounds = array<i64: 8, 16>}, {pipeline_mode = #tpu.pipeline_mode<synchronous>, transform_indices = @transform_1, window_bounds = array<i64: 16, 128>}, {pipeline_mode = #tpu.pipeline_mode<synchronous>, transform_indices = @transform_2, window_bounds = array<i64: 128, 128>}, {pipeline_mode = #tpu.pipeline_mode<synchronous>, transform_indices = @transform_3, window_bounds = array<i64: 128, 128>}, {pipeline_mode = #tpu.pipeline_mode<synchronous>, transform_indices = @transform_4, window_bounds = array<i64: 8, 128>}, {transform_indices = @transform_5, window_bounds = array<i64: 8, 128>}]} {
    %c0 = arith.constant 0 : index
    %c0_0 = arith.constant 0 : index
    %0 = vector.load %arg5[%c0, %c0_0] : memref<8x128xf32, #tpu.memory_space<vmem>>, vector<8x128xf32>
    %1 = vector.extract_strided_slice %0 {offsets = [0, 0], sizes = [1, 128], strides = [1, 1]} : vector<8x128xf32> to vector<1x128xf32>
    %2 = vector.extract_strided_slice %0 {offsets = [1, 0], sizes = [1, 128], strides = [1, 1]} : vector<8x128xf32> to vector<1x128xf32>
    %3 = vector.extract_strided_slice %0 {offsets = [2, 0], sizes = [1, 128], strides = [1, 1]} : vector<8x128xf32> to vector<1x128xf32>
    %c0_1 = arith.constant 0 : index
    %c0_2 = arith.constant 0 : index
    %4 = vector.load %arg1[%c0_1, %c0_2] : memref<8x16xf32, #tpu.memory_space<vmem>>, vector<8x16xf32>
    %c0_3 = arith.constant 0 : index
    %c0_4 = arith.constant 0 : index
    %5 = vector.load %arg2[%c0_3, %c0_4] : memref<16x128xf32, #tpu.memory_space<vmem>>, vector<16x128xf32>
    %cst = arith.constant dense<0.000000e+00> : vector<8x128xf32>
    %6 = tpu.matmul %4, %5, %cst {dimension_numbers = #tpu.dot_dimension_numbers<[1], [0], [0], [1], [0, 0, 1, 1], [], []>} : vector<8x16xf32>, vector<16x128xf32>, vector<8x128xf32> -> vector<8x128xf32>
    %7 = vector.broadcast %1 : vector<1x128xf32> to vector<8x128xf32>
    %8 = arith.addf %6, %7 : vector<8x128xf32>
    %cst_5 = arith.constant 0.000000e+00 : f32
    %9 = vector.broadcast %cst_5 : f32 to vector<8x128xf32>
    %10 = arith.maximumf %8, %9 : vector<8x128xf32>
    %c0_6 = arith.constant 0 : index
    %c0_7 = arith.constant 0 : index
    %11 = vector.load %arg3[%c0_6, %c0_7] : memref<128x128xf32, #tpu.memory_space<vmem>>, vector<128x128xf32>
    %cst_8 = arith.constant dense<0.000000e+00> : vector<8x128xf32>
    %12 = tpu.matmul %10, %11, %cst_8 {dimension_numbers = #tpu.dot_dimension_numbers<[1], [0], [0], [1], [0, 0, 1, 1], [], []>} : vector<8x128xf32>, vector<128x128xf32>, vector<8x128xf32> -> vector<8x128xf32>
    %13 = vector.broadcast %2 : vector<1x128xf32> to vector<8x128xf32>
    %14 = arith.addf %12, %13 : vector<8x128xf32>
    %cst_9 = arith.constant 0.000000e+00 : f32
    %15 = vector.broadcast %cst_9 : f32 to vector<8x128xf32>
    %16 = arith.maximumf %14, %15 : vector<8x128xf32>
    %c0_10 = arith.constant 0 : index
    %c0_11 = arith.constant 0 : index
    %17 = vector.load %arg4[%c0_10, %c0_11] : memref<128x128xf32, #tpu.memory_space<vmem>>, vector<128x128xf32>
    %cst_12 = arith.constant dense<0.000000e+00> : vector<8x128xf32>
    %18 = tpu.matmul %16, %17, %cst_12 {dimension_numbers = #tpu.dot_dimension_numbers<[1], [0], [0], [1], [0, 0, 1, 1], [], []>} : vector<8x128xf32>, vector<128x128xf32>, vector<8x128xf32> -> vector<8x128xf32>
    %19 = vector.broadcast %3 : vector<1x128xf32> to vector<8x128xf32>
    %20 = arith.addf %18, %19 : vector<8x128xf32>
    %c0_13 = arith.constant 0 : index
    %c0_14 = arith.constant 0 : index
    %21 = vector.load %arg6[%c0_13, %c0_14] : memref<8x128xf32, #tpu.memory_space<vmem>>, vector<8x128xf32>
    tpu.vector_store %arg6[%c0_13, %c0_14], %20 {strides = array<i32>} : memref<8x128xf32, #tpu.memory_space<vmem>>, vector<8x128xf32>,
    return
  }
  func.func @transform_0(%arg0: i32) -> (i32, i32) {
    %c0_i32 = arith.constant 0 : i32
    %c0_i32_0 = arith.constant 0 : i32
    return %arg0, %c0_i32 : i32, i32
  }
  func.func @transform_1(%arg0: i32) -> (i32, i32) {
    %c0_i32 = arith.constant 0 : i32
    %c0_i32_0 = arith.constant 0 : i32
    %c0_i32_1 = arith.constant 0 : i32
    return %c0_i32, %c0_i32_0 : i32, i32
  }
  func.func @transform_2(%arg0: i32) -> (i32, i32) {
    %c0_i32 = arith.constant 0 : i32
    %c0_i32_0 = arith.constant 0 : i32
    %c0_i32_1 = arith.constant 0 : i32
    return %c0_i32, %c0_i32_0 : i32, i32
  }
  func.func @transform_3(%arg0: i32) -> (i32, i32) {
    %c0_i32 = arith.constant 0 : i32
    %c0_i32_0 = arith.constant 0 : i32
    %c0_i32_1 = arith.constant 0 : i32
    return %c0_i32, %c0_i32_0 : i32, i32
  }
  func.func @transform_4(%arg0: i32) -> (i32, i32) {
    %c0_i32 = arith.constant 0 : i32
    %c0_i32_0 = arith.constant 0 : i32
    %c0_i32_1 = arith.constant 0 : i32
    return %c0_i32, %c0_i32_0 : i32, i32
  }
  func.func @transform_5(%arg0: i32) -> (i32, i32) {
    %c0_i32 = arith.constant 0 : i32
    %c0_i32_0 = arith.constant 0 : i32
    return %arg0, %c0_i32 : i32, i32
  }
}

</mosaic_0001>

<llo_original>
// kernel: net_forward.1
$region0: #{net_forward.1}
  #allocation0 [shape = 'u32[]', space=smem, size = 0x4, offset = 0x4, fixed_abs, tag = 'smem constant byte address 0x4 - core index']
  #allocation1 [shape = 'u32[72,128]{1,0:T(1,128)}', space=vmem, size = 0x9000, scoped, tag = 'internal scratch']
  %s0 = inlined_call_operand.hbm [shape: f32[2,16], index: 0, kind: input, shape index: {}]
  %s1 = inlined_call_operand.hbm [shape: f32[16,128], index: 1, kind: input, shape index: {}]
  %s2 = inlined_call_operand.hbm [shape: f32[128,128], index: 2, kind: input, shape index: {}]
  %s3 = inlined_call_operand.hbm [shape: f32[128,128], index: 3, kind: input, shape index: {}]
  %s4 = inlined_call_operand.hbm [shape: f32[8,128], index: 4, kind: input, shape index: {}]
  %s5 = inlined_call_operand.hbm [shape: f32[2,128], index: 5, kind: output, shape index: {}]
  %s6 = sld [smem:[#allocation0]]
  $region50: #{net_forward.1} parent=0
    _
  %s8 = ssub.s32 1, %s6
  %s9 = scalar_select 0, %s8, %s6
  $region1: #{net_forward.1} parent=0
    #allocation2 [shape = 'u8[4096]{0}', space=vmem, size = 0x1000, scoped, tag = 'input window, operand 0, single buffered']
    #allocation3 [shape = 's32[1]{0}', space=sflag, size = 0x4, scoped, tag = 'scoped memory for net_forward.1']
    #allocation4 [shape = 's32[1]{0}', space=sflag, size = 0x4, scoped, tag = 'scoped memory for net_forward.1']
    #allocation5 [shape = 'u8[8192]{0}', space=vmem, size = 0x2000, scoped, tag = 'input window, operand 1, single buffered']
    #allocation6 [shape = 's32[1]{0}', space=sflag, size = 0x4, scoped, tag = 'scoped memory for net_forward.1']
    #allocation7 [shape = 'u8[65536]{0}', space=vmem, size = 0x10000, scoped, tag = 'input window, operand 2, single buffered']
    #allocation8 [shape = 'u8[65536]{0}', space=vmem, size = 0x10000, scoped, tag = 'input window, operand 3, single buffered']
    #allocation9 [shape = 's32[1]{0}', space=sflag, size = 0x4, scoped, tag = 'scoped memory for net_forward.1']
    #allocation10 [shape = 'u8[4096]{0}', space=vmem, size = 0x1000, scoped, tag = 'input window, operand 4, single buffered']
    #allocation11 [shape = 'u8[4096]{0}', space=vmem, size = 0x1000, scoped, tag = 'output window, operand 0, single buffered']
    %10 = vsyncpa [#allocation3], 0
    %11 = vsyncpa [#allocation6], 0
    %12 = vsyncpa [#allocation9], 0
    %13 = vsyncpa [#allocation4], 0
    // Predicated region
    $region2: #{net_forward.1} parent=1 // pred_check
      _
    $region3: #{net_forward.1} parent=1 // pred_check_branch
      %15 = sbr.rel (0) target = $region5
    $region4: #{net_forward.1} parent=1 // pred_region
      %17 = vsyncadd [#allocation3], 96
      %s18 = sshll.u32 %s0, 4
      %s19 = int_to_ptr.hbm [resolvable:$true] %s18
      %s20 = sshll.u32 [#allocation2], 4
      %s21 = int_to_ptr.vmem [resolvable:$true] %s20
      %26 = dma.hbm_to_vmem [thread:$0]  %s19, 32, %s21, [#allocation3], 32, 32, 2
    $region5: #{net_forward.1} parent=1 // pred_fallthru
      _
    // Predicated region
    $region6: #{net_forward.1} parent=1 // pred_check
      _
    $region7: #{net_forward.1} parent=1 // pred_check_branch
      %28 = sbr.rel (0) target = $region9
    $region8: #{net_forward.1} parent=1 // pred_region
      %30 = vsyncadd [#allocation6], 0
      %s31 = sshll.u32 %s1, 4
      %s32 = int_to_ptr.hbm [resolvable:$true] %s31
      %s33 = sshll.u32 [#allocation5], 4
      %s34 = int_to_ptr.vmem [resolvable:$true] %s33
      %39 = dma.hbm_to_vmem [thread:$0]  %s32, 256, %s34, [#allocation6], 128, 128, 8
    $region9: #{net_forward.1} parent=1 // pred_fallthru
      _
    // Predicated region
    $region10: #{net_forward.1} parent=1 // pred_check
      _
    $region11: #{net_forward.1} parent=1 // pred_check_branch
      %41 = sbr.rel (0) target = $region13
    $region12: #{net_forward.1} parent=1 // pred_region
      %43 = vsyncadd [#allocation6], 0
      %s44 = sshll.u32 %s2, 4
      %s45 = int_to_ptr.hbm [resolvable:$true] %s44
      %s46 = sshll.u32 [#allocation7], 4
      %s47 = int_to_ptr.vmem [resolvable:$true] %s46
      %52 = dma.hbm_to_vmem [thread:$0]  %s45, 2048, %s47, [#allocation6], 128, 128, 8
    $region13: #{net_forward.1} parent=1 // pred_fallthru
      _
    // Predicated region
    $region14: #{net_forward.1} parent=1 // pred_check
      _
    $region15: #{net_forward.1} parent=1 // pred_check_branch
      %54 = sbr.rel (0) target = $region17
    $region16: #{net_forward.1} parent=1 // pred_region
      %56 = vsyncadd [#allocation9], 0
      %s57 = sshll.u32 %s3, 4
      %s58 = int_to_ptr.hbm [resolvable:$true] %s57
      %s59 = sshll.u32 [#allocation8], 4
      %s60 = int_to_ptr.vmem [resolvable:$true] %s59
      %65 = dma.hbm_to_vmem [thread:$0]  %s58, 2048, %s60, [#allocation9], 128, 128, 8
    $region17: #{net_forward.1} parent=1 // pred_fallthru
      _
    // Predicated region
    $region18: #{net_forward.1} parent=1 // pred_check
      _
    $region19: #{net_forward.1} parent=1 // pred_check_branch
      %67 = sbr.rel (0) target = $region21
    $region20: #{net_forward.1} parent=1 // pred_region
      %69 = vsyncadd [#allocation9], 0
      %s71 = sshll.u32 %s4, 4
      %s72 = int_to_ptr.hbm [resolvable:$true] %s71
      %s73 = sshll.u32 [#allocation10], 4
      %s74 = int_to_ptr.vmem [resolvable:$true] %s73
      %76 = dma.hbm_to_vmem [thread:$0]  %s72, 128, %s74, [#allocation9]
    $region21: #{net_forward.1} parent=1 // pred_fallthru
      _
    // Predicated region
    $region22: #{net_forward.1} parent=1 // pred_check
      _
    $region23: #{net_forward.1} parent=1 // pred_check_branch
      %78 = sbr.rel (0) target = $region25
    $region24: #{net_forward.1} parent=1 // pred_region
      %80 = dma.done [#allocation3], 128
    $region25: #{net_forward.1} parent=1 // pred_fallthru
      _
    // Predicated region
    $region26: #{net_forward.1} parent=1 // pred_check
      _
    $region27: #{net_forward.1} parent=1 // pred_check_branch
      %82 = sbr.rel (0) target = $region29
    $region28: #{net_forward.1} parent=1 // pred_region
      %84 = dma.done [#allocation6], 256
    $region29: #{net_forward.1} parent=1 // pred_fallthru
      _
    // Predicated region
    $region30: #{net_forward.1} parent=1 // pred_check
      _
    $region31: #{net_forward.1} parent=1 // pred_check_branch
      %86 = sbr.rel (0) target = $region33
    $region32: #{net_forward.1} parent=1 // pred_region
      %88 = dma.done [#allocation6], 2048
    $region33: #{net_forward.1} parent=1 // pred_fallthru
      _
    // Predicated region
    $region34: #{net_forward.1} parent=1 // pred_check
      _
    $region35: #{net_forward.1} parent=1 // pred_check_branch
      %90 = sbr.rel (0) target = $region37
    $region36: #{net_forward.1} parent=1 // pred_region
      %92 = dma.done [#allocation9], 2048
    $region37: #{net_forward.1} parent=1 // pred_fallthru
      _
    // Predicated region
    $region38: #{net_forward.1} parent=1 // pred_check
      _
    $region39: #{net_forward.1} parent=1 // pred_check_branch
      %94 = sbr.rel (0) target = $region41
    $region40: #{net_forward.1} parent=1 // pred_region
      %96 = dma.done [#allocation9], 128
    $region41: #{net_forward.1} parent=1 // pred_fallthru
      _
    %v97 = vld [vmem:[#allocation10] sm:$0xff]
    %v98 = vld [vmem:[#allocation2] sm:$0xff]
    %v99 = vld [vmem:[#allocation5] sm:$0xff]
    %v100 = vld [vmem:[#allocation5 + $0x8] sm:$0xff]
    %v101 = vperm.slane %v97, 0
    %vm102 = vcmask 130048
    %v104 = vsel %vm102, %v98, 0
    %106 = vmatpush.msra.mxu0 0.0
    %107 = vmatpush.msra.mxu0 0.0
    %108 = vmatpush.msra.mxu0 0.0
    %109 = vmatpush.msra.mxu0 0.0
    %110 = vmatpush.msra.mxu0 0.0
    %111 = vmatpush.msra.mxu0 0.0
    %112 = vmatpush.msra.mxu0 0.0
    %113 = vmatpush.msra.mxu0 0.0
    %114 = vmatpush.msra.mxu0 0.0
    %115 = vmatpush.msra.mxu0 0.0
    %116 = vmatpush.msra.mxu0 0.0
    %117 = vmatpush.msra.mxu0 0.0
    %118 = vmatpush.msra.mxu0 0.0
    %119 = vmatpush.msra.mxu0 0.0
    %120 = vmatpush.msra.mxu0 %v100
    %121 = vmatpush.msra.mxu0 %v99
    %122 = vmatmul.f32.gmra.mxu0 %v104
    %v123 = vpop.f32.mrf.mxu0
    %v124 = vadd.f32 %v101, %v123
    %125 = vdwg.mxu0
    %v126 = vmax.f32 %v124, 0.0
    %v127 = vld [vmem:[#allocation7] sm:$0xff]
    %v128 = vld [vmem:[#allocation7 + $0x8] sm:$0xff]
    %v129 = vld [vmem:[#allocation7 + $0x10] sm:$0xff]
    %v130 = vld [vmem:[#allocation7 + $0x18] sm:$0xff]
    %v131 = vld [vmem:[#allocation7 + $0x20] sm:$0xff]
    %v132 = vld [vmem:[#allocation7 + $0x28] sm:$0xff]
    %v133 = vld [vmem:[#allocation7 + $0x30] sm:$0xff]
    %v134 = vld [vmem:[#allocation7 + $0x38] sm:$0xff]
    %v135 = vld [vmem:[#allocation7 + $0x40] sm:$0xff]
    %v136 = vld [vmem:[#allocation7 + $0x48] sm:$0xff]
    %v137 = vld [vmem:[#allocation7 + $0x50] sm:$0xff]
    %v138 = vld [vmem:[#allocation7 + $0x58] sm:$0xff]
    %v139 = vld [vmem:[#allocation7 + $0x60] sm:$0xff]
    %v140 = vld [vmem:[#allocation7 + $0x68] sm:$0xff]
    %v141 = vld [vmem:[#allocation7 + $0x70] sm:$0xff]
    %v142 = vld [vmem:[#allocation7 + $0x78] sm:$0xff]
    %v143 = vperm.slane %v97, 1
    %144 = vmatpush.msra.mxu0 %v142
    %145 = vmatpush.msra.mxu0 %v141
    %146 = vmatpush.msra.mxu0 %v140
    %147 = vmatpush.msra.mxu0 %v139
    %148 = vmatpush.msra.mxu0 %v138
    %149 = vmatpush.msra.mxu0 %v137
    %150 = vmatpush.msra.mxu0 %v136
    %151 = vmatpush.msra.mxu0 %v135
    %152 = vmatpush.msra.mxu0 %v134
    %153 = vmatpush.msra.mxu0 %v133
    %154 = vmatpush.msra.mxu0 %v132
    %155 = vmatpush.msra.mxu0 %v131
    %156 = vmatpush.msra.mxu0 %v130
    %157 = vmatpush.msra.mxu0 %v129
    %158 = vmatpush.msra.mxu0 %v128
    %159 = vmatpush.msra.mxu0 %v127
    %160 = vmatmul.f32.gmra.mxu0 %v126
    %v161 = vpop.f32.mrf.mxu0
    %v162 = vadd.f32 %v143, %v161
    %163 = vdwg.mxu0
    %v164 = vmax.f32 %v162, 0.0
    %v165 = vld [vmem:[#allocation8] sm:$0xff]
    %v166 = vld [vmem:[#allocation8 + $0x8] sm:$0xff]
    %v167 = vld [vmem:[#allocation8 + $0x10] sm:$0xff]
    %v168 = vld [vmem:[#allocation8 + $0x18] sm:$0xff]
    %v169 = vld [vmem:[#allocation8 + $0x20] sm:$0xff]
    %v170 = vld [vmem:[#allocation8 + $0x28] sm:$0xff]
    %v171 = vld [vmem:[#allocation8 + $0x30] sm:$0xff]
    %v172 = vld [vmem:[#allocation8 + $0x38] sm:$0xff]
    %v173 = vld [vmem:[#allocation8 + $0x40] sm:$0xff]
    %v174 = vld [vmem:[#allocation8 + $0x48] sm:$0xff]
    %v175 = vld [vmem:[#allocation8 + $0x50] sm:$0xff]
    %v176 = vld [vmem:[#allocation8 + $0x58] sm:$0xff]
    %v177 = vld [vmem:[#allocation8 + $0x60] sm:$0xff]
    %v178 = vld [vmem:[#allocation8 + $0x68] sm:$0xff]
    %v179 = vld [vmem:[#allocation8 + $0x70] sm:$0xff]
    %v180 = vld [vmem:[#allocation8 + $0x78] sm:$0xff]
    %v181 = vperm.slane %v97, 2
    %182 = vmatpush.msra.mxu0 %v180
    %183 = vmatpush.msra.mxu0 %v179
    %184 = vmatpush.msra.mxu0 %v178
    %185 = vmatpush.msra.mxu0 %v177
    %186 = vmatpush.msra.mxu0 %v176
    %187 = vmatpush.msra.mxu0 %v175
    %188 = vmatpush.msra.mxu0 %v174
    %189 = vmatpush.msra.mxu0 %v173
    %190 = vmatpush.msra.mxu0 %v172
    %191 = vmatpush.msra.mxu0 %v171
    %192 = vmatpush.msra.mxu0 %v170
    %193 = vmatpush.msra.mxu0 %v169
    %194 = vmatpush.msra.mxu0 %v168
    %195 = vmatpush.msra.mxu0 %v167
    %196 = vmatpush.msra.mxu0 %v166
    %197 = vmatpush.msra.mxu0 %v165
    %198 = vmatmul.f32.gmra.mxu0 %v164
    %v199 = vpop.f32.mrf.mxu0
    %v200 = vadd.f32 %v181, %v199
    %201 = vdwg.mxu0
    %202 = vst [vmem:[#allocation11] sm:$0xff] %v200
    // Predicated region
    $region42: #{net_forward.1} parent=1 // pred_check
      _
    $region43: #{net_forward.1} parent=1 // pred_check_branch
      %204 = sbr.rel (0) target = $region45
    $region44: #{net_forward.1} parent=1 // pred_region
      %206 = vsyncadd [#allocation4], 96
      %s207 = sshll.u32 [#allocation11], 4
      %s208 = int_to_ptr.vmem [resolvable:$true] %s207
      %s209 = sshll.u32 %s5, 4
      %s210 = int_to_ptr.hbm [resolvable:$true] %s209
      %215 = dma.vmem_to_hbm [thread:$0]  %s208, 32, %s210, [#allocation4], 32, 32, 2
    $region45: #{net_forward.1} parent=1 // pred_fallthru
      _
    // Predicated region
    $region46: #{net_forward.1} parent=1 // pred_check
      _
    $region47: #{net_forward.1} parent=1 // pred_check_branch
      %217 = sbr.rel (0) target = $region49
    $region48: #{net_forward.1} parent=1 // pred_region
      %219 = dma.done [#allocation4], 128
    $region49: #{net_forward.1} parent=1 // pred_fallthru
      _
    %220 = vsyncpa [#allocation3], 1
    %221 = vsyncpa [#allocation6], 1
    %222 = vsyncpa [#allocation9], 1
    %223 = vsyncpa [#allocation4], 1

</llo_original>
